<compile_context>
chip_gen: v6e
topology: v6e:2x2x1
jax: 0.10.0
libtpu: 0.0.40
codegen_flags: <defaults>
</compile_context>

<pallas_src>
import functools
from typing import Any, NamedTuple

import jax
import jax.numpy as jnp
from jax.experimental import pallas as pl
from jax.experimental.pallas import tpu as pltpu


def _round_up(x, m):
    return ((x + m - 1) // m) * m


# ----------------------------------------------------------------------------
# Per-generation configuration
# ----------------------------------------------------------------------------
class LSTMConfig(NamedTuple):
    th: int                 # hidden (lane) tile; each gate slice is th-wide
    tb_max: int             # maximum batch tile
    gate_dtype: Any         # dtype of the gate epilogue (bf16 on v6e/v7x)
    vmem_limit_bytes: int


def select_lstm_config():
    """Tile sizes / epilogue dtype / VMEM budget per TPU generation."""
    try:
        kind = jax.devices()[0].device_kind.lower()
    except Exception:  # pragma: no cover - fall through to conservative config
        kind = ""
    if "v6" in kind:
        # 128 MiB VMEM, bf16 VPU/EUP: big tiles, bf16 gate epilogue.
        return LSTMConfig(th=256, tb_max=512, gate_dtype=jnp.bfloat16,
                          vmem_limit_bytes=96 * 1024 * 1024)
    if "v5" in kind:
        # 128 MiB VMEM but no bf16 VPU/EUP and a single vector-store slot:
        # f32 epilogue, smaller batch tile to limit live f32 intermediates.
        return LSTMConfig(th=128, tb_max=128, gate_dtype=jnp.float32,
                          vmem_limit_bytes=96 * 1024 * 1024)
    # v7x (64 MiB VMEM) and anything unrecognized: conservative footprint.
    return LSTMConfig(th=128, tb_max=256, gate_dtype=jnp.bfloat16,
                      vmem_limit_bytes=48 * 1024 * 1024)


# ----------------------------------------------------------------------------
# Kernel
# ----------------------------------------------------------------------------
def lstm_cell_kernel(x_ref, h_ref, c_ref, wx_ref, wh_ref, b_ref,
                     h_out_ref, c_out_ref, *, th, gate_dtype):
    # x_ref : [TB, I]     compute dtype (bf16)
    # h_ref : [TB, H]     compute dtype
    # c_ref : [TB, TH]    f32 cell-state tile
    # wx_ref: [I, 4*TH]   gate-interleaved [i|f|o|c~] columns for this H tile
    # wh_ref: [H, 4*TH]
    # b_ref : [1, 4*TH]   f32
    #
    # Two MXU dots accumulating in f32; bias folded in AFTER the dots so no
    # broadcast temp is materialized ahead of the MXU results.
    z = (jnp.dot(x_ref[...], wx_ref[...], preferred_element_type=jnp.float32)
         + jnp.dot(h_ref[...], wh_ref[...], preferred_element_type=jnp.float32)
         + b_ref[...])

    zg = z.astype(gate_dtype)   # bf16 epilogue on v6e/v7x, f32 on v5e

    def _sigmoid(v):
        # tanh-form sigmoid: a single EUP pass per gate (vs exp + reciprocal).
        return 0.5 * jnp.tanh(0.5 * v) + 0.5

    # Gate-interleaved packing -> every slice starts on a 128-lane boundary.
    i_gate = _sigmoid(zg[:, 0 * th:1 * th])
    f_gate = _sigmoid(zg[:, 1 * th:2 * th])
    o_gate = _sigmoid(zg[:, 2 * th:3 * th])
    c_tilde = jnp.tanh(zg[:, 3 * th:4 * th])

    # Cell-state update stays in f32 (c_ref / c_out are f32).
    c_new = f_gate * c_ref[...] + (i_gate * c_tilde).astype(jnp.float32)
    h_out_ref[...] = (o_gate * jnp.tanh(c_new)).astype(h_out_ref.dtype)
    c_out_ref[...] = c_new


# ----------------------------------------------------------------------------
# Wrapper
# ----------------------------------------------------------------------------
class PackedLSTMParams(NamedTuple):
    wx: jax.Array        # [I, 4*Hp]  gate-interleaved (i|f|o|c~) per th slab
    wh: jax.Array        # [H, 4*Hp]
    b: jax.Array         # [1, 4*Hp]  f32
    th: int              # carried with the params so packing/kernel agree
    input_size: int
    hidden_size: int


def lstm_cell_pallas(X, h, c, params, cfg=None, *, compute_dtype=jnp.bfloat16,
                     h_out_dtype=None, in_place_cell_state=True):
    """One LSTMCell step.  X: [B, I], h/c: [B, H]; params from pack_params.

    Returns (h_new, c_new).  h_new is emitted in `h_out_dtype` (default: the
    compute dtype, pass X.dtype for full-precision parity with the PyTorch
    module); c_new stays f32.
    """
    if cfg is None:
        cfg = select_lstm_config()

    B, I = X.shape
    H = params.hidden_size
    th = params.th
    Hp = params.b.shape[-1] // 4
    # th lives inside `params`, so the packing interleave and the kernel's
    # gate slicing can never silently disagree.
    assert Hp == _round_up(H, th), "packed params do not match hidden_size/th"
    assert params.wx.shape == (I, 4 * Hp) and params.wh.shape == (H, 4 * Hp)

    n_h = Hp // th
    # Batch tile: full batch if it fits, else an 8-aligned tile; a partial
    # trailing batch tile is handled by Pallas edge-block masking (padded rows
    # are garbage on read and masked on write — safe because discarded).
    TB = B if B <= cfg.tb_max else cfg.tb_max
    n_b = pl.cdiv(B, TB)

    x_in = X if X.dtype == compute_dtype else X.astype(compute_dtype)
    h_in = h if h.dtype == compute_dtype else h.astype(compute_dtype)
    c_in = c if c.dtype == jnp.float32 else c.astype(jnp.float32)

    # Hidden-dim padding is only needed when H is not a multiple of th (toy
    # sizes); realistic LSTM widths take the zero-copy path.
    pad_hidden = Hp != H
    if pad_hidden:
        c_in = jnp.zeros((B, Hp), jnp.float32).at[:, :H].set(c_in)

    h_dtype = compute_dtype if h_out_dtype is None else h_out_dtype
    kernel = functools.partial(lstm_cell_kernel, th=th,
                               gate_dtype=cfg.gate_dtype)

    h_out, c_out = pl.pallas_call(
        kernel,
        out_shape=(
            jax.ShapeDtypeStruct((B, Hp), h_dtype),      # h
            jax.ShapeDtypeStruct((B, Hp), jnp.float32),  # c stays f32
        ),
        grid_spec=pltpu.PrefetchScalarGridSpec(
            num_scalar_prefetch=0,
            # Weight-stationary: hidden tiles OUTER, batch tiles INNER, so the
            # W_x / W_h / b blocks below are revisited (no re-DMA) across bi
            # and each weight slab is streamed from HBM exactly once.
            grid=(n_h, n_b),
            in_specs=[
                pl.BlockSpec((TB, I), lambda hj, bi: (bi, 0)),       # X
                pl.BlockSpec((TB, H), lambda hj, bi: (bi, 0)),       # h
                pl.BlockSpec((TB, th), lambda hj, bi: (bi, hj)),     # c
                # Note: for very large I+H on v7x (64 MiB VMEM) add a K
                # (contraction) grid axis marked "arbitrary" with an f32
                # accumulator scratch so weight blocks become [tk, 4*th].
                pl.BlockSpec((I, 4 * th), lambda hj, bi: (0, hj)),   # W_x
                pl.BlockSpec((H, 4 * th), lambda hj, bi: (0, hj)),   # W_h
                pl.BlockSpec((1, 4 * th), lambda hj, bi: (0, hj)),   # b
            ],
            out_specs=(
                pl.BlockSpec((TB, th), lambda hj, bi: (bi, hj)),     # h_out
                pl.BlockSpec((TB, th), lambda hj, bi: (bi, hj)),     # c_out
            ),
        ),
        # Cell state updated in place: input 2 (c) aliases output 1 (c_out).
        input_output_aliases={2: 1} if in_place_cell_state else {},
        compiler_params=pltpu.CompilerParams(
            # Hidden axis "parallel": on v7x megacore each TensorCore gets a
            # disjoint slab of weight columns (no duplicated weight traffic).
            # Batch axis runs sequentially per core (weight-stationary).
            dimension_semantics=("parallel", "arbitrary"),
            vmem_limit_bytes=cfg.vmem_limit_bytes,
        ),
    )(x_in, h_in, c_in, params.wx, params.wh, params.b)

    if pad_hidden:
        h_out, c_out = h_out[:, :H], c_out[:, :H]
    return h_out, c_out


# ----------------------------------------------------------------------------
# Parameters (PyTorch-equivalent init) and packing
# ----------------------------------------------------------------------------
def xavier_uniform(key, shape, dtype=jnp.float32):
    # torch.nn.init.xavier_uniform_ on a Linear weight [out, in].
    fan_out, fan_in = shape
    bound = (6.0 / (fan_in + fan_out)) ** 0.5
    return jax.random.uniform(key, shape, dtype=dtype, minval=-bound, maxval=bound)


def make_params(key, input_size, hidden_size, bias=True):
    """Per-gate PyTorch-layout params in (i, f, o, c~) order: W [H, I+H], b [H]."""
    D = input_size + hidden_size
    keys = jax.random.split(key, 4)
    Ws = [xavier_uniform(k, (hidden_size, D)) for k in keys]
    bval = 0.01 if bias else 0.0
    bs = [jnp.full((hidden_size,), bval, jnp.float32) for _ in range(4)]
    return Ws, bs


def _interleave_gates(mats, th):
    # mats: 4 arrays [K, Hp] in (i, f, o, c~) order -> [K, 4*Hp] where for
    # hidden tile j, columns [j*4*th:(j+1)*4*th] = [i_j | f_j | o_j | c~_j].
    K, Hp = mats[0].shape
    n = Hp // th
    stacked = jnp.stack([m.reshape(K, n, th) for m in mats], axis=2)  # [K,n,4,th]
    return stacked.reshape(K, n * 4 * th)


def pack_params(Ws, bs, input_size, hidden_size, *, th,
                weight_dtype=jnp.bfloat16):
    """Pack per-gate Linear weights into gate-interleaved, lane-aligned slabs."""
    Hp = _round_up(hidden_size, th)

    def pad_h(m):  # pad the hidden/output (last) axis up to Hp with zeros
        return jnp.pad(m, ((0, 0), (0, Hp - hidden_size)))

    Wx = [pad_h(W[:, :input_size].T) for W in Ws]   # [I, Hp]
    Wh = [pad_h(W[:, input_size:].T) for W in Ws]   # [H, Hp]
    bm = [pad_h(b[None, :]) for b in bs]            # [1, Hp]

    return PackedLSTMParams(
        wx=_interleave_gates(Wx, th).astype(weight_dtype),
        wh=_interleave_gates(Wh, th).astype(weight_dtype),
        b=_interleave_gates(bm, th).astype(jnp.float32),
        th=th, input_size=input_size, hidden_size=hidden_size)


# ----------------------------------------------------------------------------
# Reference (mirrors the PyTorch module, optionally modelling quantization)
# ----------------------------------------------------------------------------
def reference_lstm_cell(X, h, c, Ws, bs, input_size,
                        compute_dtype=None, gate_dtype=None):
    """Pure-JAX mirror of the PyTorch forward.  When compute_dtype/gate_dtype
    are given, models the kernel's bf16 MXU inputs (f32 accumulation) and the
    gate-epilogue dtype."""
    def q(a, dt):
        return a if dt is None else a.astype(dt).astype(jnp.float32)

    inp = jnp.concatenate([q(X, compute_dtype), q(h, compute_dtype)], axis=-1)
    zs = [q(inp @ q(W, compute_dtype).T + b, gate_dtype) for W, b in zip(Ws, bs)]
    i, f, o = (q(jax.nn.sigmoid(z), gate_dtype) for z in zs[:3])
    c_tilde = q(jnp.tanh(zs[3]), gate_dtype)
    c_new = f * c + q(i * c_tilde, gate_dtype)
    h_new = o * jnp.tanh(c_new)
    return h_new, c_new


# ----------------------------------------------------------------------------
# Demo / correctness check
# ----------------------------------------------------------------------------
if __name__ == "__main__":
    cfg = select_lstm_config()

    def run_case(case_key, batch, input_size, hidden_size):
        kx, kh, kc, kp = jax.random.split(case_key, 4)
        X = jax.random.normal(kx, (batch, input_size), dtype=jnp.float32)
        h0 = jax.random.normal(kh, (batch, hidden_size), dtype=jnp.float32)
        c0 = jax.random.normal(kc, (batch, hidden_size), dtype=jnp.float32)

        Ws, bs = make_params(kp, input_size, hidden_size, bias=True)
        params = pack_params(Ws, bs, input_size, hidden_size, th=cfg.th)

        h1, c1 = lstm_cell_pallas(X, h0, c0, params, cfg)
        jax.block_until_ready((h1, c1))
        h1 = h1.astype(jnp.float32)

        # Tight check vs a reference modelling the kernel's quantization
        # (bf16 MXU inputs, f32 accumulation, gate math in cfg.gate_dtype).
        hq, cq = reference_lstm_cell(X, h0, c0, Ws, bs, input_size,
                                     compute_dtype=jnp.bfloat16,
                                     gate_dtype=cfg.gate_dtype)
        assert jnp.allclose(h1, hq, atol=2e-2, rtol=2e-2), \
            float(jnp.max(jnp.abs(h1 - hq)))
        assert jnp.allclose(c1, cq, atol=2e-2, rtol=2e-2), \
            float(jnp.max(jnp.abs(c1 - cq)))

        # Loose check vs the pure-f32 PyTorch-equivalent forward pass.
        hf, cf = reference_lstm_cell(X, h0, c0, Ws, bs, input_size)
        assert jnp.allclose(h1, hf, atol=5e-2, rtol=5e-2)
        assert jnp.allclose(c1, cf, atol=5e-2, rtol=5e-2)

    key = jax.random.PRNGKey(0)
    k1, k2 = jax.random.split(key)
    # Module-spec-sized case (H not a multiple of th -> padded-hidden path).
    run_case(k1, batch=2, input_size=16, hidden_size=32)
    # Lane-aligned case (H a multiple of th on every generation -> zero-pad
    # free path, multiple hidden tiles on v5e/v7x).
    run_case(k2, batch=4, input_size=64, hidden_size=256)

    print("KERNEL_OK")
</pallas_src>

<mosaic_0001>
module attributes {stable_mosaic.version = 11 : i64} {
  func.func @lstm_cell_kernel(%arg0: i32, %arg1: i32, %arg2: memref<2x16xbf16, #tpu.memory_space<vmem>>, %arg3: memref<2x32xbf16, #tpu.memory_space<vmem>>, %arg4: memref<2x128xf32, #tpu.memory_space<vmem>>, %arg5: memref<16x512xbf16, #tpu.memory_space<vmem>>, %arg6: memref<32x512xbf16, #tpu.memory_space<vmem>>, %arg7: memref<1x512xf32, #tpu.memory_space<vmem>>, %arg8: memref<2x128xbf16, #tpu.memory_space<vmem>>, %arg9: memref<2x128xf32, #tpu.memory_space<vmem>>) attributes {dimension_semantics = [#tpu.dimension_semantics<parallel>, #tpu.dimension_semantics<arbitrary>], iteration_bounds = array<i64: 1, 1>, scalar_prefetch = 0 : i64, scratch_operands = 0 : i64, tpu.core_type = #tpu.core_type<tc>, window_params = [{transform_indices = @transform_0, window_bounds = array<i64: 2, 16>}, {transform_indices = @transform_1, window_bounds = array<i64: 2, 32>}, {transform_indices = @transform_2, window_bounds = array<i64: 2, 128>}, {transform_indices = @transform_3, window_bounds = array<i64: 16, 512>}, {transform_indices = @transform_4, window_bounds = array<i64: 32, 512>}, {transform_indices = @transform_5, window_bounds = array<i64: 1, 512>}, {transform_indices = @transform_6, window_bounds = array<i64: 2, 128>}, {transform_indices = @transform_7, window_bounds = array<i64: 2, 128>}]} {
    %c0 = arith.constant 0 : index
    %c0_0 = arith.constant 0 : index
    %0 = vector.load %arg2[%c0, %c0_0] : memref<2x16xbf16, #tpu.memory_space<vmem>>, vector<2x16xbf16>
    %c0_1 = arith.constant 0 : index
    %c0_2 = arith.constant 0 : index
    %1 = vector.load %arg5[%c0_1, %c0_2] : memref<16x512xbf16, #tpu.memory_space<vmem>>, vector<16x512xbf16>
    %cst = arith.constant dense<0.000000e+00> : vector<2x512xf32>
    %2 = tpu.matmul %0, %1, %cst {dimension_numbers = #tpu.dot_dimension_numbers<[1], [0], [0], [1], [0, 0, 1, 1], [], []>} : vector<2x16xbf16>, vector<16x512xbf16>, vector<2x512xf32> -> vector<2x512xf32>
    %c0_3 = arith.constant 0 : index
    %c0_4 = arith.constant 0 : index
    %3 = vector.load %arg3[%c0_3, %c0_4] : memref<2x32xbf16, #tpu.memory_space<vmem>>, vector<2x32xbf16>
    %c0_5 = arith.constant 0 : index
    %c0_6 = arith.constant 0 : index
    %4 = vector.load %arg6[%c0_5, %c0_6] : memref<32x512xbf16, #tpu.memory_space<vmem>>, vector<32x512xbf16>
    %cst_7 = arith.constant dense<0.000000e+00> : vector<2x512xf32>
    %5 = tpu.matmul %3, %4, %cst_7 {dimension_numbers = #tpu.dot_dimension_numbers<[1], [0], [0], [1], [0, 0, 1, 1], [], []>} : vector<2x32xbf16>, vector<32x512xbf16>, vector<2x512xf32> -> vector<2x512xf32>
    %6 = arith.addf %2, %5 : vector<2x512xf32>
    %c0_8 = arith.constant 0 : index
    %c0_9 = arith.constant 0 : index
    %7 = vector.load %arg7[%c0_8, %c0_9] : memref<1x512xf32, #tpu.memory_space<vmem>>, vector<1x512xf32>
    %8 = vector.broadcast %7 : vector<1x512xf32> to vector<2x512xf32>
    %9 = arith.addf %6, %8 : vector<2x512xf32>
    %10 = arith.truncf %9 : vector<2x512xf32> to vector<2x512xbf16>
    %11 = vector.extract_strided_slice %10 {offsets = [0, 0], sizes = [2, 128], strides = [1, 1]} : vector<2x512xbf16> to vector<2x128xbf16>
    %cst_10 = arith.constant 5.000000e-01 : bf16
    %12 = vector.broadcast %cst_10 : bf16 to vector<2x128xbf16>
    %13 = arith.mulf %12, %11 : vector<2x128xbf16>
    %14 = math.tanh %13 : vector<2x128xbf16>
    %cst_11 = arith.constant 5.000000e-01 : bf16
    %15 = vector.broadcast %cst_11 : bf16 to vector<2x128xbf16>
    %16 = arith.mulf %15, %14 : vector<2x128xbf16>
    %cst_12 = arith.constant 5.000000e-01 : bf16
    %17 = vector.broadcast %cst_12 : bf16 to vector<2x128xbf16>
    %18 = arith.addf %16, %17 : vector<2x128xbf16>
    %19 = vector.extract_strided_slice %10 {offsets = [0, 128], sizes = [2, 128], strides = [1, 1]} : vector<2x512xbf16> to vector<2x128xbf16>
    %cst_13 = arith.constant 5.000000e-01 : bf16
    %20 = vector.broadcast %cst_13 : bf16 to vector<2x128xbf16>
    %21 = arith.mulf %20, %19 : vector<2x128xbf16>
    %22 = math.tanh %21 : vector<2x128xbf16>
    %cst_14 = arith.constant 5.000000e-01 : bf16
    %23 = vector.broadcast %cst_14 : bf16 to vector<2x128xbf16>
    %24 = arith.mulf %23, %22 : vector<2x128xbf16>
    %cst_15 = arith.constant 5.000000e-01 : bf16
    %25 = vector.broadcast %cst_15 : bf16 to vector<2x128xbf16>
    %26 = arith.addf %24, %25 : vector<2x128xbf16>
    %27 = vector.extract_strided_slice %10 {offsets = [0, 256], sizes = [2, 128], strides = [1, 1]} : vector<2x512xbf16> to vector<2x128xbf16>
    %cst_16 = arith.constant 5.000000e-01 : bf16
    %28 = vector.broadcast %cst_16 : bf16 to vector<2x128xbf16>
    %29 = arith.mulf %28, %27 : vector<2x128xbf16>
    %30 = math.tanh %29 : vector<2x128xbf16>
    %cst_17 = arith.constant 5.000000e-01 : bf16
    %31 = vector.broadcast %cst_17 : bf16 to vector<2x128xbf16>
    %32 = arith.mulf %31, %30 : vector<2x128xbf16>
    %cst_18 = arith.constant 5.000000e-01 : bf16
    %33 = vector.broadcast %cst_18 : bf16 to vector<2x128xbf16>
    %34 = arith.addf %32, %33 : vector<2x128xbf16>
    %35 = vector.extract_strided_slice %10 {offsets = [0, 384], sizes = [2, 128], strides = [1, 1]} : vector<2x512xbf16> to vector<2x128xbf16>
    %36 = math.tanh %35 : vector<2x128xbf16>
    %c0_19 = arith.constant 0 : index
    %c0_20 = arith.constant 0 : index
    %37 = vector.load %arg4[%c0_19, %c0_20] : memref<2x128xf32, #tpu.memory_space<vmem>>, vector<2x128xf32>
    %38 = arith.extf %26 : vector<2x128xbf16> to vector<2x128xf32>
    %39 = arith.mulf %38, %37 : vector<2x128xf32>
    %40 = arith.mulf %18, %36 : vector<2x128xbf16>
    %41 = arith.extf %40 : vector<2x128xbf16> to vector<2x128xf32>
    %42 = arith.addf %39, %41 : vector<2x128xf32>
    %43 = math.tanh %42 : vector<2x128xf32>
    %44 = arith.extf %34 : vector<2x128xbf16> to vector<2x128xf32>
    %45 = arith.mulf %44, %43 : vector<2x128xf32>
    %46 = arith.truncf %45 : vector<2x128xf32> to vector<2x128xbf16>
    %c0_21 = arith.constant 0 : index
    %c0_22 = arith.constant 0 : index
    %47 = vector.load %arg8[%c0_21, %c0_22] : memref<2x128xbf16, #tpu.memory_space<vmem>>, vector<2x128xbf16>
    tpu.vector_store %arg8[%c0_21, %c0_22], %46 {strides = array<i32>} : memref<2x128xbf16, #tpu.memory_space<vmem>>, vector<2x128xbf16>,
    %c0_23 = arith.constant 0 : index
    %c0_24 = arith.constant 0 : index
    %48 = vector.load %arg9[%c0_23, %c0_24] : memref<2x128xf32, #tpu.memory_space<vmem>>, vector<2x128xf32>
    tpu.vector_store %arg9[%c0_23, %c0_24], %42 {strides = array<i32>} : memref<2x128xf32, #tpu.memory_space<vmem>>, vector<2x128xf32>,
    return
  }
  func.func @transform_0(%arg0: i32, %arg1: i32) -> (i32, i32) {
    %c0_i32 = arith.constant 0 : i32
    %c0_i32_0 = arith.constant 0 : i32
    return %arg1, %c0_i32 : i32, i32
  }
  func.func @transform_1(%arg0: i32, %arg1: i32) -> (i32, i32) {
    %c0_i32 = arith.constant 0 : i32
    %c0_i32_0 = arith.constant 0 : i32
    return %arg1, %c0_i32 : i32, i32
  }
  func.func @transform_2(%arg0: i32, %arg1: i32) -> (i32, i32) {
    %c0_i32 = arith.constant 0 : i32
    return %arg1, %arg0 : i32, i32
  }
  func.func @transform_3(%arg0: i32, %arg1: i32) -> (i32, i32) {
    %c0_i32 = arith.constant 0 : i32
    %c0_i32_0 = arith.constant 0 : i32
    return %c0_i32, %arg0 : i32, i32
  }
  func.func @transform_4(%arg0: i32, %arg1: i32) -> (i32, i32) {
    %c0_i32 = arith.constant 0 : i32
    %c0_i32_0 = arith.constant 0 : i32
    return %c0_i32, %arg0 : i32, i32
  }
  func.func @transform_5(%arg0: i32, %arg1: i32) -> (i32, i32) {
    %c0_i32 = arith.constant 0 : i32
    %c0_i32_0 = arith.constant 0 : i32
    return %c0_i32, %arg0 : i32, i32
  }
  func.func @transform_6(%arg0: i32, %arg1: i32) -> (i32, i32) {
    %c0_i32 = arith.constant 0 : i32
    return %arg1, %arg0 : i32, i32
  }
  func.func @transform_7(%arg0: i32, %arg1: i32) -> (i32, i32) {
    %c0_i32 = arith.constant 0 : i32
    return %arg1, %arg0 : i32, i32
  }
}

</mosaic_0001>

<llo_original>
// kernel: tpu_custom_call.1
$region0: #{tpu_custom_call.1}
  #allocation0 [shape = 'u32[]', space=smem, size = 0x4, offset = 0x4, fixed_abs, tag = 'smem constant byte address 0x4 - core index']
  #allocation1 [shape = 'u32[144,128]{1,0:T(1,128)}', space=vmem, size = 0x12000, scoped, tag = 'internal scratch']
  %s0 = inlined_call_operand.vmem [shape: bf16[2,16], index: 0, kind: input, shape index: {}]
  %s1 = inlined_call_operand.vmem [shape: bf16[2,32], index: 1, kind: input, shape index: {}]
  %s2 = inlined_call_operand.hbm [shape: f32[2,128], index: 2, kind: input, shape index: {}, may-alias: {2,7}]
  %s3 = inlined_call_operand.hbm [shape: bf16[16,512], index: 3, kind: input, shape index: {}]
  %s4 = inlined_call_operand.hbm [shape: bf16[32,512], index: 4, kind: input, shape index: {}]
  %s5 = inlined_call_operand.vmem [shape: f32[1,512], index: 5, kind: input, shape index: {}]
  %s6 = inlined_call_operand.hbm [shape: bf16[2,128], index: 6, kind: output, shape index: {0}]
  %s7 = inlined_call_operand.hbm [shape: f32[2,128], index: 7, kind: output, shape index: {1}, may-alias: {2,7}]
  %8 = xla_tuple %s6, %s7
  %s9 = sld [smem:[#allocation0]]
  $region54: #{tpu_custom_call.1} parent=0
    _
  %s11 = ssub.s32 1, %s9
  %s12 = scalar_select 0, %s11, %s9
  $region1: #{tpu_custom_call.1} parent=0
    #allocation2 [shape = 'u8[1024]{0}', space=vmem, size = 0x400, scoped, tag = 'input window, operand 2, single buffered']
    #allocation3 [shape = 's32[1]{0}', space=sflag, size = 0x4, scoped, tag = 'scoped memory for tpu_custom_call.1']
    #allocation4 [shape = 's32[1]{0}', space=sflag, size = 0x4, scoped, tag = 'scoped memory for tpu_custom_call.1']
    #allocation5 [shape = 'u8[16384]{0}', space=vmem, size = 0x4000, scoped, tag = 'input window, operand 3, single buffered']
    #allocation6 [shape = 's32[1]{0}', space=sflag, size = 0x4, scoped, tag = 'scoped memory for tpu_custom_call.1']
    #allocation7 [shape = 'u8[32768]{0}', space=vmem, size = 0x8000, scoped, tag = 'input window, operand 4, single buffered']
    #allocation8 [shape = 'u8[512]{0}', space=vmem, size = 0x400, scoped, tag = 'output window, operand 0, single buffered']
    #allocation9 [shape = 'u8[1024]{0}', space=vmem, size = 0x400, scoped, tag = 'output window, operand 1, single buffered']
    #allocation10 [shape = 's32[1]{0}', space=sflag, size = 0x4, scoped, tag = 'scoped memory for tpu_custom_call.1']
    %13 = vsyncpa [#allocation3], 0
    %14 = vsyncpa [#allocation6], 0
    %15 = vsyncpa [#allocation4], 0
    %16 = vsyncpa [#allocation10], 0
    // Predicated region
    $region2: #{tpu_custom_call.1} parent=1 // pred_check
      _
    $region3: #{tpu_custom_call.1} parent=1 // pred_check_branch
      %18 = sbr.rel (0) target = $region5
    $region4: #{tpu_custom_call.1} parent=1 // pred_region
      _
    $region5: #{tpu_custom_call.1} parent=1 // pred_fallthru
      _
    // Predicated region
    $region6: #{tpu_custom_call.1} parent=1 // pred_check
      _
    $region7: #{tpu_custom_call.1} parent=1 // pred_check_branch
      %20 = sbr.rel (0) target = $region9
    $region8: #{tpu_custom_call.1} parent=1 // pred_region
      _
    $region9: #{tpu_custom_call.1} parent=1 // pred_fallthru
      _
    // Predicated region
    $region10: #{tpu_custom_call.1} parent=1 // pred_check
      _
    $region11: #{tpu_custom_call.1} parent=1 // pred_check_branch
      %22 = sbr.rel (0) target = $region13
    $region12: #{tpu_custom_call.1} parent=1 // pred_region
      %s24 = ssub.s32 32, 32
      %25 = vsyncadd [#allocation3], %s24
      %s27 = sshll.u32 [#allocation2], 4
      %s28 = int_to_ptr.vmem [resolvable:$true] %s27
      %30 = dma.hbm_to_vmem [thread:$0]  %s2, 32, %s28, [#allocation3]
    $region13: #{tpu_custom_call.1} parent=1 // pred_fallthru
      _
    // Predicated region
    $region14: #{tpu_custom_call.1} parent=1 // pred_check
      _
    $region15: #{tpu_custom_call.1} parent=1 // pred_check_branch
      %32 = sbr.rel (0) target = $region17
    $region16: #{tpu_custom_call.1} parent=1 // pred_region
      %s34 = ssub.s32 512, 512
      %35 = vsyncadd [#allocation6], %s34
      %s36 = sshll.u32 [#allocation5], 4
      %s37 = int_to_ptr.vmem [resolvable:$true] %s36
      %42 = dma.hbm_to_vmem [thread:$0]  %s3, 512, %s37, [#allocation6], 256, 256, 16
    $region17: #{tpu_custom_call.1} parent=1 // pred_fallthru
      _
    // Predicated region
    $region18: #{tpu_custom_call.1} parent=1 // pred_check
      _
    $region19: #{tpu_custom_call.1} parent=1 // pred_check_branch
      %44 = sbr.rel (0) target = $region21
    $region20: #{tpu_custom_call.1} parent=1 // pred_region
      %s46 = ssub.s32 1024, 1024
      %47 = vsyncadd [#allocation6], %s46
      %s48 = sshll.u32 [#allocation7], 4
      %s49 = int_to_ptr.vmem [resolvable:$true] %s48
      %54 = dma.hbm_to_vmem [thread:$0]  %s4, 1024, %s49, [#allocation6], 256, 256, 16
    $region21: #{tpu_custom_call.1} parent=1 // pred_fallthru
      _
    // Predicated region
    $region22: #{tpu_custom_call.1} parent=1 // pred_check
      _
    $region23: #{tpu_custom_call.1} parent=1 // pred_check_branch
      %56 = sbr.rel (0) target = $region25
    $region24: #{tpu_custom_call.1} parent=1 // pred_region
      _
    $region25: #{tpu_custom_call.1} parent=1 // pred_fallthru
      _
    // Predicated region
    $region26: #{tpu_custom_call.1} parent=1 // pred_check
      _
    $region27: #{tpu_custom_call.1} parent=1 // pred_check_branch
      %58 = sbr.rel (0) target = $region29
    $region28: #{tpu_custom_call.1} parent=1 // pred_region
      %59 = dma.done [#allocation3], 32
    $region29: #{tpu_custom_call.1} parent=1 // pred_fallthru
      _
    // Predicated region
    $region30: #{tpu_custom_call.1} parent=1 // pred_check
      _
    $region31: #{tpu_custom_call.1} parent=1 // pred_check_branch
      %61 = sbr.rel (0) target = $region33
    $region32: #{tpu_custom_call.1} parent=1 // pred_region
      %62 = dma.done [#allocation6], 512
    $region33: #{tpu_custom_call.1} parent=1 // pred_fallthru
      _
    // Predicated region
    $region34: #{tpu_custom_call.1} parent=1 // pred_check
      _
    $region35: #{tpu_custom_call.1} parent=1 // pred_check_branch
      %64 = sbr.rel (0) target = $region37
    $region36: #{tpu_custom_call.1} parent=1 // pred_region
      %65 = dma.done [#allocation6], 1024
    $region37: #{tpu_custom_call.1} parent=1 // pred_fallthru
      _
    %v68 = vld [vmem:[%s0] sm:$0x1]
    %v69 = vld [vmem:[#allocation5] sm:$0xff]
    %v70 = vld [vmem:[#allocation5 + $0x8] sm:$0xff]
    %v71 = vld [vmem:[#allocation5 + $0x10] sm:$0xff]
    %v72 = vld [vmem:[#allocation5 + $0x18] sm:$0xff]
    %v73 = vld [vmem:[%s1] sm:$0x1]
    %v74 = vld [vmem:[#allocation7] sm:$0xff]
    %v75 = vld [vmem:[#allocation7 + $0x8] sm:$0xff]
    %v76 = vld [vmem:[#allocation7 + $0x10] sm:$0xff]
    %v77 = vld [vmem:[#allocation7 + $0x18] sm:$0xff]
    %v78 = vld [vmem:[#allocation7 + $0x20] sm:$0xff]
    %v79 = vld [vmem:[#allocation7 + $0x28] sm:$0xff]
    %v80 = vld [vmem:[#allocation7 + $0x30] sm:$0xff]
    %v81 = vld [vmem:[#allocation7 + $0x38] sm:$0xff]
    %v90 = vunpack.c.l.b16 %v74
    %v91 = vunpack.c.h.b16 %v74
    %v92 = vunpack.c.l.b16 %v75
    %v93 = vunpack.c.h.b16 %v75
    %v94 = vunpack.c.l.b16 %v76
    %v95 = vunpack.c.h.b16 %v76
    %v96 = vunpack.c.l.b16 %v77
    %v97 = vunpack.c.h.b16 %v77
    %v98 = vunpack.c.l.b16 %v78
    %v99 = vunpack.c.h.b16 %v78
    %v100 = vunpack.c.l.b16 %v79
    %v101 = vunpack.c.h.b16 %v79
    %v102 = vunpack.c.l.b16 %v80
    %v103 = vunpack.c.h.b16 %v80
    %v104 = vunpack.c.l.b16 %v81
    %v105 = vunpack.c.h.b16 %v81
    %v106 = vpack.c.b16 %v94, %v90
    %v107 = vpack.c.b16 %v95, %v91
    %v108 = vpack.c.b16 %v96, %v92
    %v109 = vpack.c.b16 %v97, %v93
    %v110 = vpack.c.b16 %v102, %v98
    %v111 = vpack.c.b16 %v103, %v99
    %v112 = vpack.c.b16 %v104, %v100
    %v113 = vpack.c.b16 %v105, %v101
    %vm122 = vcmask 261120
    %v124 = vsel %vm122, %v73, 0
    %126 = vmatprep.subr.bf16.mxu0 0
    %127 = vmatpush1.bf16.msra.mxu0 0
    %128 = vmatprep.subr.bf16.mxu0 0
    %129 = vmatpush1.bf16.msra.mxu0 0
    %130 = vmatprep.subr.bf16.mxu0 0
    %131 = vmatpush1.bf16.msra.mxu0 0
    %132 = vmatprep.subr.bf16.mxu0 0
    %133 = vmatpush1.bf16.msra.mxu0 0
    %134 = vmatprep.subr.bf16.mxu0 0
    %135 = vmatpush1.bf16.msra.mxu0 0
    %136 = vmatprep.subr.bf16.mxu0 0
    %137 = vmatpush1.bf16.msra.mxu0 0
    %138 = vmatprep.subr.bf16.mxu0 %v111
    %139 = vmatpush1.bf16.msra.mxu0 %v110
    %140 = vmatprep.subr.bf16.mxu0 %v107
    %141 = vmatpush1.bf16.msra.mxu0 %v106
    %142 = vmatprep.subr.bf16.mxu0 0
    %143 = vmatpush2.bf16.msra.mxu0 0
    %144 = vmatprep.subr.bf16.mxu0 0
    %145 = vmatpush2.bf16.msra.mxu0 0
    %146 = vmatprep.subr.bf16.mxu0 0
    %147 = vmatpush2.bf16.msra.mxu0 0
    %148 = vmatprep.subr.bf16.mxu0 0
    %149 = vmatpush2.bf16.msra.mxu0 0
    %150 = vmatprep.subr.bf16.mxu0 0
    %151 = vmatpush2.bf16.msra.mxu0 0
    %152 = vmatprep.subr.bf16.mxu0 0
    %153 = vmatpush2.bf16.msra.mxu0 0
    %154 = vmatprep.subr.bf16.mxu0 0
    %155 = vmatpush2.bf16.msra.mxu0 0
    %156 = vmatprep.subr.bf16.mxu0 0
    %157 = vmatpush2.bf16.msra.mxu0 0
    %158 = vmatprep.mubr.bf16.mxu0 0
    %159 = vmatmul.mubr.bf16.gmra.mxu0 %v124
    %v160 = vpop.f32.mrf.mxu0
    %v161 = vadd.f32 0.0, %v160
    %v162 = vpop.f32.mrf.mxu0
    %v163 = vadd.f32 0.0, %v162
    %v164 = vpop.f32.mrf.mxu0
    %v165 = vpop.f32.mrf.mxu0
    %166 = vdwg.mxu0
    %167 = vmatprep.subr.bf16.mxu0 0
    %168 = vmatpush1.bf16.msra.mxu0 0
    %169 = vmatprep.subr.bf16.mxu0 0
    %170 = vmatpush1.bf16.msra.mxu0 0
    %171 = vmatprep.subr.bf16.mxu0 0
    %172 = vmatpush1.bf16.msra.mxu0 0
    %173 = vmatprep.subr.bf16.mxu0 0
    %174 = vmatpush1.bf16.msra.mxu0 0
    %175 = vmatprep.subr.bf16.mxu0 0
    %176 = vmatpush1.bf16.msra.mxu0 0
    %177 = vmatprep.subr.bf16.mxu0 0
    %178 = vmatpush1.bf16.msra.mxu0 0
    %179 = vmatprep.subr.bf16.mxu0 %v113
    %180 = vmatpush1.bf16.msra.mxu0 %v112
    %181 = vmatprep.subr.bf16.mxu0 %v109
    %182 = vmatpush1.bf16.msra.mxu0 %v108
    %183 = vmatprep.subr.bf16.mxu0 0
    %184 = vmatpush2.bf16.msra.mxu0 0
    %185 = vmatprep.subr.bf16.mxu0 0
    %186 = vmatpush2.bf16.msra.mxu0 0
    %187 = vmatprep.subr.bf16.mxu0 0
    %188 = vmatpush2.bf16.msra.mxu0 0
    %189 = vmatprep.subr.bf16.mxu0 0
    %190 = vmatpush2.bf16.msra.mxu0 0
    %191 = vmatprep.subr.bf16.mxu0 0
    %192 = vmatpush2.bf16.msra.mxu0 0
    %193 = vmatprep.subr.bf16.mxu0 0
    %194 = vmatpush2.bf16.msra.mxu0 0
    %195 = vmatprep.subr.bf16.mxu0 0
    %196 = vmatpush2.bf16.msra.mxu0 0
    %197 = vmatprep.subr.bf16.mxu0 0
    %198 = vmatpush2.bf16.msra.mxu0 0
    %199 = vmatprep.mubr.bf16.mxu0 0
    %200 = vmatmul.mubr.bf16.gmra.mxu0 %v124
    %v201 = vpop.f32.mrf.mxu0
    %v202 = vadd.f32 0.0, %v201
    %v203 = vpop.f32.mrf.mxu0
    %v204 = vadd.f32 0.0, %v203
    %v205 = vpop.f32.mrf.mxu0
    %v206 = vpop.f32.mrf.mxu0
    %207 = vdwg.mxu0
    %v212 = vunpack.c.l.b16 %v69
    %v213 = vunpack.c.h.b16 %v69
    %v214 = vunpack.c.l.b16 %v70
    %v215 = vunpack.c.h.b16 %v70
    %v216 = vunpack.c.l.b16 %v71
    %v217 = vunpack.c.h.b16 %v71
    %v218 = vunpack.c.l.b16 %v72
    %v219 = vunpack.c.h.b16 %v72
    %v220 = vpack.c.b16 %v216, %v212
    %v221 = vpack.c.b16 %v217, %v213
    %v222 = vpack.c.b16 %v218, %v214
    %v223 = vpack.c.b16 %v219, %v215
    %vm228 = vcmask 130048
    %v230 = vsel %vm228, %v68, 0
    %232 = vmatprep.subr.bf16.mxu0 0
    %233 = vmatpush1.bf16.msra.mxu0 0
    %234 = vmatprep.subr.bf16.mxu0 0
    %235 = vmatpush1.bf16.msra.mxu0 0
    %236 = vmatprep.subr.bf16.mxu0 0
    %237 = vmatpush1.bf16.msra.mxu0 0
    %238 = vmatprep.subr.bf16.mxu0 0
    %239 = vmatpush1.bf16.msra.mxu0 0
    %240 = vmatprep.subr.bf16.mxu0 0
    %241 = vmatpush1.bf16.msra.mxu0 0
    %242 = vmatprep.subr.bf16.mxu0 0
    %243 = vmatpush1.bf16.msra.mxu0 0
    %244 = vmatprep.subr.bf16.mxu0 0
    %245 = vmatpush1.bf16.msra.mxu0 0
    %246 = vmatprep.subr.bf16.mxu0 %v221
    %247 = vmatpush1.bf16.msra.mxu0 %v220
    %248 = vmatprep.subr.bf16.mxu0 0
    %249 = vmatpush2.bf16.msra.mxu0 0
    %250 = vmatprep.subr.bf16.mxu0 0
    %251 = vmatpush2.bf16.msra.mxu0 0
    %252 = vmatprep.subr.bf16.mxu0 0
    %253 = vmatpush2.bf16.msra.mxu0 0
    %254 = vmatprep.subr.bf16.mxu0 0
    %255 = vmatpush2.bf16.msra.mxu0 0
    %256 = vmatprep.subr.bf16.mxu0 0
    %257 = vmatpush2.bf16.msra.mxu0 0
    %258 = vmatprep.subr.bf16.mxu0 0
    %259 = vmatpush2.bf16.msra.mxu0 0
    %260 = vmatprep.subr.bf16.mxu0 0
    %261 = vmatpush2.bf16.msra.mxu0 0
    %262 = vmatprep.subr.bf16.mxu0 0
    %263 = vmatpush2.bf16.msra.mxu0 0
    %264 = vmatprep.mubr.bf16.mxu0 0
    %265 = vmatmul.mubr.bf16.gmra.mxu0 %v230
    %v266 = vpop.f32.mrf.mxu0
    %v267 = vadd.f32 %v161, %v266
    %v268 = vpop.f32.mrf.mxu0
    %v269 = vadd.f32 %v163, %v268
    %v270 = vpop.f32.mrf.mxu0
    %v271 = vpop.f32.mrf.mxu0
    %272 = vdwg.mxu0
    %273 = vmatprep.subr.bf16.mxu0 0
    %274 = vmatpush1.bf16.msra.mxu0 0
    %275 = vmatprep.subr.bf16.mxu0 0
    %276 = vmatpush1.bf16.msra.mxu0 0
    %277 = vmatprep.subr.bf16.mxu0 0
    %278 = vmatpush1.bf16.msra.mxu0 0
    %279 = vmatprep.subr.bf16.mxu0 0
    %280 = vmatpush1.bf16.msra.mxu0 0
    %281 = vmatprep.subr.bf16.mxu0 0
    %282 = vmatpush1.bf16.msra.mxu0 0
    %283 = vmatprep.subr.bf16.mxu0 0
    %284 = vmatpush1.bf16.msra.mxu0 0
    %285 = vmatprep.subr.bf16.mxu0 0
    %286 = vmatpush1.bf16.msra.mxu0 0
    %287 = vmatprep.subr.bf16.mxu0 %v223
    %288 = vmatpush1.bf16.msra.mxu0 %v222
    %289 = vmatprep.subr.bf16.mxu0 0
    %290 = vmatpush2.bf16.msra.mxu0 0
    %291 = vmatprep.subr.bf16.mxu0 0
    %292 = vmatpush2.bf16.msra.mxu0 0
    %293 = vmatprep.subr.bf16.mxu0 0
    %294 = vmatpush2.bf16.msra.mxu0 0
    %295 = vmatprep.subr.bf16.mxu0 0
    %296 = vmatpush2.bf16.msra.mxu0 0
    %297 = vmatprep.subr.bf16.mxu0 0
    %298 = vmatpush2.bf16.msra.mxu0 0
    %299 = vmatprep.subr.bf16.mxu0 0
    %300 = vmatpush2.bf16.msra.mxu0 0
    %301 = vmatprep.subr.bf16.mxu0 0
    %302 = vmatpush2.bf16.msra.mxu0 0
    %303 = vmatprep.subr.bf16.mxu0 0
    %304 = vmatpush2.bf16.msra.mxu0 0
    %305 = vmatprep.mubr.bf16.mxu0 0
    %306 = vmatmul.mubr.bf16.gmra.mxu0 %v230
    %v307 = vpop.f32.mrf.mxu0
    %v308 = vadd.f32 %v202, %v307
    %v309 = vpop.f32.mrf.mxu0
    %v310 = vadd.f32 %v204, %v309
    %v311 = vpop.f32.mrf.mxu0
    %v312 = vpop.f32.mrf.mxu0
    %313 = vdwg.mxu0
    %v314 = vld [vmem:[%s5] sm:$0xf]
    %v316 = vlaneseq
    %v317 = vshrl.u32 %v316, 7
    %v318 = vsub.s32 0, %v317
    %v319 = vrot.slane %v314, %v318
    %v320 = vlaneseq
    %v321 = vshrl.u32 %v320, 7
    %v322 = vsub.s32 1, %v321
    %v323 = vrot.slane %v314, %v322
    %v324 = vlaneseq
    %v325 = vshrl.u32 %v324, 7
    %v326 = vsub.s32 2, %v325
    %v327 = vrot.slane %v314, %v326
    %v328 = vlaneseq
    %v329 = vshrl.u32 %v328, 7
    %v330 = vsub.s32 3, %v329
    %v331 = vrot.slane %v314, %v330
    %v336 = vadd.f32 %v267, %v319
    %v337 = vadd.f32 %v269, %v323
    %v338 = vadd.f32 %v308, %v327
    %v339 = vadd.f32 %v310, %v331
    %v340 = vpack.c.bf16 %v336, %v336
    %v341 = vpack.c.bf16 %v337, %v337
    %v342 = vpack.c.bf16 %v338, %v338
    %v343 = vpack.c.bf16 %v339, %v339
    %v344 = vmul.bf16 %v340, 1056980736
    %v345 = vtanh.bf16.pop %v344
    %v346 = vmul.bf16 %v345, 1056980736
    %v347 = vadd.bf16 %v346, 1056980736
    %v348 = vmul.bf16 %v341, 1056980736
    %v349 = vtanh.bf16.pop %v348
    %v350 = vmul.bf16 %v349, 1056980736
    %v351 = vadd.bf16 %v350, 1056980736
    %v352 = vmul.bf16 %v342, 1056980736
    %v353 = vtanh.bf16.pop %v352
    %v354 = vmul.bf16 %v353, 1056980736
    %v355 = vadd.bf16 %v354, 1056980736
    %v356 = vtanh.bf16.pop %v343
    %v357 = vld [vmem:[#allocation2] sm:$0x3]
    %v358 = vunpack.c.l.bf16 %v351
    %v359 = vmul.f32 %v358, %v357
    %v360 = vmul.bf16 %v347, %v356
    %v361 = vunpack.c.l.bf16 %v360
    %v362 = vadd.f32 %v359, %v361
    %v363 = vtanh.pop %v362
    %v364 = vunpack.c.l.bf16 %v355
    %v365 = vmul.f32 %v364, %v363
    %v366 = vpack.c.bf16 %v365, %v365
    %367 = vst [vmem:[#allocation8] sm:$0x1] %v366
    %368 = vst [vmem:[#allocation9] sm:$0x3] %v362
    // Predicated region
    $region38: #{tpu_custom_call.1} parent=1 // pred_check
      _
    $region39: #{tpu_custom_call.1} parent=1 // pred_check_branch
      %370 = sbr.rel (0) target = $region41
    $region40: #{tpu_custom_call.1} parent=1 // pred_region
      %s372 = ssub.s32 16, 16
      %373 = vsyncadd [#allocation4], %s372
      %s375 = sshll.u32 [#allocation8], 4
      %s376 = int_to_ptr.vmem [resolvable:$true] %s375
      %378 = dma.vmem_to_hbm [thread:$0]  %s376, 16, %s6, [#allocation4]
    $region41: #{tpu_custom_call.1} parent=1 // pred_fallthru
      _
    // Predicated region
    $region42: #{tpu_custom_call.1} parent=1 // pred_check
      _
    $region43: #{tpu_custom_call.1} parent=1 // pred_check_branch
      %380 = sbr.rel (0) target = $region45
    $region44: #{tpu_custom_call.1} parent=1 // pred_region
      %s382 = ssub.s32 32, 32
      %383 = vsyncadd [#allocation10], %s382
      %s385 = sshll.u32 [#allocation9], 4
      %s386 = int_to_ptr.vmem [resolvable:$true] %s385
      %388 = dma.vmem_to_hbm [thread:$0]  %s386, 32, %s7, [#allocation10]
    $region45: #{tpu_custom_call.1} parent=1 // pred_fallthru
      _
    // Predicated region
    $region46: #{tpu_custom_call.1} parent=1 // pred_check
      _
    $region47: #{tpu_custom_call.1} parent=1 // pred_check_branch
      %390 = sbr.rel (0) target = $region49
    $region48: #{tpu_custom_call.1} parent=1 // pred_region
      %391 = dma.done [#allocation4], 16
    $region49: #{tpu_custom_call.1} parent=1 // pred_fallthru
      _
    // Predicated region
    $region50: #{tpu_custom_call.1} parent=1 // pred_check
      _
    $region51: #{tpu_custom_call.1} parent=1 // pred_check_branch
      %393 = sbr.rel (0) target = $region53
    $region52: #{tpu_custom_call.1} parent=1 // pred_region
      %394 = dma.done [#allocation10], 32
    $region53: #{tpu_custom_call.1} parent=1 // pred_fallthru
      _
    %395 = vsyncpa [#allocation3], 1
    %396 = vsyncpa [#allocation6], 1
    %397 = vsyncpa [#allocation4], 1
    %398 = vsyncpa [#allocation10], 1

</llo_original>
